<compile_context>
chip_gen: v7x
topology: tpu7x:2x2x1
jax: 0.10.0
libtpu: 0.0.40
codegen_flags: <defaults>
</compile_context>

<pallas_src>
import functools

import jax
import jax.numpy as jnp
from jax import lax
from jax.experimental import pallas as pl
from jax.experimental.pallas import tpu as pltpu


def _round_up(a: int, b: int) -> int:
    return (a + b - 1) // b * b


def dec_kernel(x_ref, c_ref, csq_ref, q_ref, *, alpha: float, k_real: int):
    # x_ref: (TN, D) native dtype; c_ref: (K_pad, D) native dtype
    # csq_ref: (1, K_pad) f32 precomputed ||c||^2 (0 in padded columns)
    xf = x_ref[...].astype(jnp.float32)
    x_sq = jnp.sum(xf * xf, axis=-1, keepdims=True)            # (TN, 1)

    # x · c^T on the MXU without materializing a transpose of c.
    xc = lax.dot_general(
        x_ref[...], c_ref[...],
        dimension_numbers=(((1,), (1,)), ((), ())),
        preferred_element_type=jnp.float32,
    )                                                          # (TN, K_pad)

    dist = jnp.maximum(x_sq + csq_ref[...] - 2.0 * xc, 0.0)    # (TN, K_pad)

    inv_alpha = 1.0 / alpha                                    # compile-time const
    q = 1.0 / (1.0 + dist * inv_alpha)

    # Student-t exponent, strength-reduced (no exp/log pow when avoidable).
    exp = (alpha + 1.0) / 2.0
    if exp != 1.0:
        if float(exp).is_integer() and 1.0 < exp <= 4.0:
            p = q
            for _ in range(int(exp) - 1):
                p = p * q
            q = p
        elif float(2.0 * exp).is_integer() and 0.0 < exp < 4.0:
            # half-integer: q**exp = sqrt(q) * q**floor(exp)
            r = jnp.sqrt(q)
            for _ in range(int(exp)):
                r = r * q
            q = r
        else:
            q = q ** exp

    # Padded cluster columns must contribute exactly 0 mass to the row-sum.
    k_pad = q.shape[-1]
    if k_pad > k_real:
        col = lax.broadcasted_iota(jnp.int32, q.shape, 1)
        q = jnp.where(col < k_real, q, 0.0)

    row_sum = jnp.sum(q, axis=-1, keepdims=True)               # (TN, 1)
    inv = pl.reciprocal(row_sum, approx=True)
    inv = inv * (2.0 - row_sum * inv)   # one Newton step -> ~f32 accuracy
    q_ref[...] = (q * inv).astype(q_ref.dtype)


def dec_forward(x: jax.Array, cluster_centers: jax.Array, alpha: float = 1.0,
                tn_max: int = 1024):
    """Pallas implementation of DEC.forward (soft cluster assignment q)."""
    n, d = x.shape
    k, d2 = cluster_centers.shape
    assert d == d2, "feature dims must match"

    # Lane-dense cluster dim for full-width stores and a full MXU result tile.
    k_pad = _round_up(max(k, 128), 128)
    c_pad = jnp.zeros((k_pad, d), dtype=cluster_centers.dtype).at[:k].set(
        cluster_centers)

    # Hoisted ||c||^2 (padded rows are zero, so their squared norms are 0).
    c32 = c_pad.astype(jnp.float32)
    c_sq = jnp.sum(c32 * c32, axis=-1)[None, :]                # (1, K_pad) f32

    # Batch tiling: big tiles for pipelining, but never bigger than the batch.
    tn = min(tn_max, _round_up(n, 8))
    n_pad = _round_up(n, tn)
    if n_pad != n:
        x_p = jnp.zeros((n_pad, d), dtype=x.dtype).at[:n].set(x)
    else:
        x_p = x

    kernel = functools.partial(dec_kernel, alpha=float(alpha), k_real=k)
    q_pad = pl.pallas_call(
        kernel,
        out_shape=jax.ShapeDtypeStruct((n_pad, k_pad), jnp.float32),
        grid=(n_pad // tn,),
        in_specs=[
            pl.BlockSpec((tn, d), lambda i: (i, 0)),        # x tile (native dtype)
            pl.BlockSpec((k_pad, d), lambda i: (0, 0)),     # centers (resident)
            pl.BlockSpec((1, k_pad), lambda i: (0, 0)),     # ||c||^2 (resident)
        ],
        out_specs=pl.BlockSpec((tn, k_pad), lambda i: (i, 0)),
        compiler_params=pltpu.CompilerParams(
            dimension_semantics=("parallel",),
        ),
    )(x_p, c_pad, c_sq)

    return q_pad[:n, :k]


def dec_forward_ref(x, cluster_centers, alpha: float = 1.0):
    """Pure-JAX reference mirroring the PyTorch code literally."""
    diff = x[:, None, :].astype(jnp.float32) - cluster_centers[None, :, :].astype(jnp.float32)
    q = 1.0 / (1.0 + jnp.sum(diff * diff, axis=2) / alpha)
    q = q ** ((alpha + 1.0) / 2.0)
    q = q / jnp.sum(q, axis=1, keepdims=True)
    return q


if __name__ == "__main__":
    # Deterministic synthetic setup (mirrors torch.manual_seed(42) init, but
    # generated with JAX PRNG — synthetic kernel, no checkpoint load).
    n_clusters = 4
    bottleneck_size = 32
    batch = 8
    alpha = 1.0

    key = jax.random.PRNGKey(0)
    k_x, k_x2 = jax.random.split(key)
    x = jax.random.normal(k_x, (batch, bottleneck_size), dtype=jnp.float32)
    cluster_centers = jax.random.normal(
        jax.random.PRNGKey(42), (n_clusters, bottleneck_size), dtype=jnp.float32
    )

    # --- small case (single tile, alpha=1 -> power specialized away) ---
    q = dec_forward(x, cluster_centers, alpha=alpha)
    q = jax.block_until_ready(q)
    q_ref = dec_forward_ref(x, cluster_centers, alpha=alpha)
    assert q.shape == (batch, n_clusters)
    assert jnp.allclose(q, q_ref, atol=1e-5, rtol=1e-5), "mismatch vs reference"
    assert jnp.allclose(jnp.sum(q, axis=1), 1.0, atol=1e-5), "rows must sum to 1"

    # --- larger case: exercises batch tiling (grid > 1) + row padding ---
    x2 = jax.random.normal(k_x2, (300, bottleneck_size), dtype=jnp.float32)
    q2 = jax.block_until_ready(dec_forward(x2, cluster_centers, alpha=alpha,
                                           tn_max=128))
    q2_ref = dec_forward_ref(x2, cluster_centers, alpha=alpha)
    assert q2.shape == (300, n_clusters)
    assert jnp.allclose(q2, q2_ref, atol=1e-5, rtol=1e-5), "tiled mismatch"

    # --- non-default alpha: exercises the half-integer power path (q**1.5) ---
    q3 = jax.block_until_ready(dec_forward(x, cluster_centers, alpha=2.0))
    q3_ref = dec_forward_ref(x, cluster_centers, alpha=2.0)
    assert jnp.allclose(q3, q3_ref, atol=1e-4, rtol=1e-4), "alpha=2 mismatch"

    print("KERNEL_OK")
</pallas_src>

<mosaic_0001>
module attributes {stable_mosaic.version = 11 : i64} {
  func.func @dec_kernel(%arg0: i32, %arg1: memref<8x32xf32, #tpu.memory_space<vmem>>, %arg2: memref<128x32xf32, #tpu.memory_space<vmem>>, %arg3: memref<1x128xf32, #tpu.memory_space<vmem>>, %arg4: memref<8x128xf32, #tpu.memory_space<vmem>>) attributes {dimension_semantics = [#tpu.dimension_semantics<parallel>], iteration_bounds = array<i64: 1>, scalar_prefetch = 0 : i64, scratch_operands = 0 : i64, tpu.core_type = #tpu.core_type<tc>, window_params = [{transform_indices = @transform_0, window_bounds = array<i64: 8, 32>}, {pipeline_mode = #tpu.pipeline_mode<synchronous>, transform_indices = @transform_1, window_bounds = array<i64: 128, 32>}, {pipeline_mode = #tpu.pipeline_mode<synchronous>, transform_indices = @transform_2, window_bounds = array<i64: 1, 128>}, {transform_indices = @transform_3, window_bounds = array<i64: 8, 128>}]} {
    %c0 = arith.constant 0 : index
    %c0_0 = arith.constant 0 : index
    %0 = vector.load %arg1[%c0, %c0_0] : memref<8x32xf32, #tpu.memory_space<vmem>>, vector<8x32xf32>
    %1 = arith.mulf %0, %0 : vector<8x32xf32>
    %cst = arith.constant dense<0.000000e+00> : vector<8xf32>
    %2 = vector.multi_reduction <add>, %1, %cst [1] : vector<8x32xf32> to vector<8xf32>
    %3 = vector.shape_cast %2 : vector<8xf32> to vector<8x1xf32>
    %c0_1 = arith.constant 0 : index
    %c0_2 = arith.constant 0 : index
    %4 = vector.load %arg1[%c0_1, %c0_2] : memref<8x32xf32, #tpu.memory_space<vmem>>, vector<8x32xf32>
    %c0_3 = arith.constant 0 : index
    %c0_4 = arith.constant 0 : index
    %5 = vector.load %arg2[%c0_3, %c0_4] : memref<128x32xf32, #tpu.memory_space<vmem>>, vector<128x32xf32>
    %cst_5 = arith.constant dense<0.000000e+00> : vector<8x128xf32>
    %6 = tpu.matmul %4, %5, %cst_5 {dimension_numbers = #tpu.dot_dimension_numbers<[1], [1], [0], [0], [0, 0, 1, 0], [], []>} : vector<8x32xf32>, vector<128x32xf32>, vector<8x128xf32> -> vector<8x128xf32>
    %c0_6 = arith.constant 0 : index
    %c0_7 = arith.constant 0 : index
    %7 = vector.load %arg3[%c0_6, %c0_7] : memref<1x128xf32, #tpu.memory_space<vmem>>, vector<1x128xf32>
    %8 = vector.broadcast %3 : vector<8x1xf32> to vector<8x128xf32>
    %9 = vector.broadcast %7 : vector<1x128xf32> to vector<8x128xf32>
    %10 = arith.addf %8, %9 : vector<8x128xf32>
    %cst_8 = arith.constant 2.000000e+00 : f32
    %11 = vector.broadcast %cst_8 : f32 to vector<8x128xf32>
    %12 = arith.mulf %11, %6 : vector<8x128xf32>
    %13 = arith.subf %10, %12 : vector<8x128xf32>
    %cst_9 = arith.constant 0.000000e+00 : f32
    %14 = vector.broadcast %cst_9 : f32 to vector<8x128xf32>
    %15 = arith.maximumf %13, %14 : vector<8x128xf32>
    %cst_10 = arith.constant 1.000000e+00 : f32
    %16 = vector.broadcast %cst_10 : f32 to vector<8x128xf32>
    %17 = arith.mulf %15, %16 : vector<8x128xf32>
    %cst_11 = arith.constant 1.000000e+00 : f32
    %18 = vector.broadcast %cst_11 : f32 to vector<8x128xf32>
    %19 = arith.addf %18, %17 : vector<8x128xf32>
    %cst_12 = arith.constant 1.000000e+00 : f32
    %20 = vector.broadcast %cst_12 : f32 to vector<8x128xf32>
    %21 = arith.divf %20, %19 : vector<8x128xf32>
    %22 = tpu.iota {dimensions = array<i32: 1>} : vector<8x128xi32>
    %c4_i32 = arith.constant 4 : i32
    %23 = vector.broadcast %c4_i32 : i32 to vector<8x128xi32>
    %24 = arith.cmpi slt, %22, %23 : vector<8x128xi32>
    %cst_13 = arith.constant 0.000000e+00 : f32
    %25 = vector.broadcast %cst_13 : f32 to vector<8x128xf32>
    %26 = arith.select %24, %21, %25 : vector<8x128xi1>, vector<8x128xf32>
    %cst_14 = arith.constant dense<0.000000e+00> : vector<8xf32>
    %27 = vector.multi_reduction <add>, %26, %cst_14 [1] : vector<8x128xf32> to vector<8xf32>
    %28 = vector.shape_cast %27 : vector<8xf32> to vector<8x1xf32>
    %29 = tpu.reciprocal %28 {approx = true} : vector<8x1xf32> -> vector<8x1xf32>
    %30 = arith.mulf %28, %29 : vector<8x1xf32>
    %cst_15 = arith.constant 2.000000e+00 : f32
    %31 = vector.broadcast %cst_15 : f32 to vector<8x1xf32>
    %32 = arith.subf %31, %30 : vector<8x1xf32>
    %33 = arith.mulf %29, %32 : vector<8x1xf32>
    %34 = vector.broadcast %33 : vector<8x1xf32> to vector<8x128xf32>
    %35 = arith.mulf %26, %34 : vector<8x128xf32>
    %c0_16 = arith.constant 0 : index
    %c0_17 = arith.constant 0 : index
    %36 = vector.load %arg4[%c0_16, %c0_17] : memref<8x128xf32, #tpu.memory_space<vmem>>, vector<8x128xf32>
    tpu.vector_store %arg4[%c0_16, %c0_17], %35 {strides = array<i32>} : memref<8x128xf32, #tpu.memory_space<vmem>>, vector<8x128xf32>,
    return
  }
  func.func @transform_0(%arg0: i32) -> (i32, i32) {
    %c0_i32 = arith.constant 0 : i32
    %c0_i32_0 = arith.constant 0 : i32
    return %arg0, %c0_i32 : i32, i32
  }
  func.func @transform_1(%arg0: i32) -> (i32, i32) {
    %c0_i32 = arith.constant 0 : i32
    %c0_i32_0 = arith.constant 0 : i32
    %c0_i32_1 = arith.constant 0 : i32
    return %c0_i32, %c0_i32_0 : i32, i32
  }
  func.func @transform_2(%arg0: i32) -> (i32, i32) {
    %c0_i32 = arith.constant 0 : i32
    %c0_i32_0 = arith.constant 0 : i32
    %c0_i32_1 = arith.constant 0 : i32
    return %c0_i32, %c0_i32_0 : i32, i32
  }
  func.func @transform_3(%arg0: i32) -> (i32, i32) {
    %c0_i32 = arith.constant 0 : i32
    %c0_i32_0 = arith.constant 0 : i32
    return %arg0, %c0_i32 : i32, i32
  }
}

</mosaic_0001>

<llo_original>
// kernel: tpu_custom_call.1
$region0: #{tpu_custom_call.1}
  #allocation0 [shape = 'u32[]', space=smem, size = 0x4, offset = 0x4, fixed_abs, tag = 'smem constant byte address 0x4 - core index']
  #allocation1 [shape = 'u32[144,128]{1,0:T(1,128)}', space=vmem, size = 0x12000, scoped, tag = 'internal scratch']
  %s0 = inlined_call_operand.vmem [shape: f32[8,32], index: 0, kind: input, shape index: {}]
  %s1 = inlined_call_operand.vmem [shape: f32[128,32], index: 1, kind: input, shape index: {}]
  %s2 = inlined_call_operand.vmem [shape: f32[1,128], index: 2, kind: input, shape index: {}]
  %s3 = inlined_call_operand.hbm [shape: f32[8,128], index: 3, kind: output, shape index: {}]
  %s4 = sld [smem:[#allocation0]]
  $region22: #{tpu_custom_call.1} parent=0
    _
  %s6 = ssub.s32 1, %s4
  %s7 = scalar_select 0, %s6, %s4
  $region1: #{tpu_custom_call.1} parent=0
    #allocation2 [shape = 'u8[4096]{0}', space=vmem, size = 0x1000, scoped, tag = 'output window, operand 0, single buffered']
    #allocation3 [shape = 's32[1]{0}', space=sflag, size = 0x4, scoped, tag = 'scoped memory for tpu_custom_call.1']
    %8 = vsyncpa [#allocation3], 0
    // Predicated region
    $region2: #{tpu_custom_call.1} parent=1 // pred_check
      _
    $region3: #{tpu_custom_call.1} parent=1 // pred_check_branch
      %10 = sbr.rel (0) target = $region5
    $region4: #{tpu_custom_call.1} parent=1 // pred_region
      _
    $region5: #{tpu_custom_call.1} parent=1 // pred_fallthru
      _
    // Predicated region
    $region6: #{tpu_custom_call.1} parent=1 // pred_check
      _
    $region7: #{tpu_custom_call.1} parent=1 // pred_check_branch
      %12 = sbr.rel (0) target = $region9
    $region8: #{tpu_custom_call.1} parent=1 // pred_region
      _
    $region9: #{tpu_custom_call.1} parent=1 // pred_fallthru
      _
    // Predicated region
    $region10: #{tpu_custom_call.1} parent=1 // pred_check
      _
    $region11: #{tpu_custom_call.1} parent=1 // pred_check_branch
      %14 = sbr.rel (0) target = $region13
    $region12: #{tpu_custom_call.1} parent=1 // pred_region
      _
    $region13: #{tpu_custom_call.1} parent=1 // pred_fallthru
      _
    %v15 = vld [vmem:[%s0] sm:$0xff]
    %v16 = vmul.f32 %v15, %v15
    %vm17 = vcmask 261120
    %v18 = vsel %vm17, %v16, 0.0
    %19 = vadd.xlane.f32.xlu0 %v18
    %v20 = vpop.xlane.xlu0 %19
    %v21 = vld [vmem:[%s1] sm:$0xff]
    %v22 = vld [vmem:[%s1 + $0x8] sm:$0xff]
    %v23 = vld [vmem:[%s1 + $0x10] sm:$0xff]
    %v24 = vld [vmem:[%s1 + $0x18] sm:$0xff]
    %v25 = vld [vmem:[%s1 + $0x20] sm:$0xff]
    %v26 = vld [vmem:[%s1 + $0x28] sm:$0xff]
    %v27 = vld [vmem:[%s1 + $0x30] sm:$0xff]
    %v28 = vld [vmem:[%s1 + $0x38] sm:$0xff]
    %v29 = vld [vmem:[%s1 + $0x40] sm:$0xff]
    %v30 = vld [vmem:[%s1 + $0x48] sm:$0xff]
    %v31 = vld [vmem:[%s1 + $0x50] sm:$0xff]
    %v32 = vld [vmem:[%s1 + $0x58] sm:$0xff]
    %v33 = vld [vmem:[%s1 + $0x60] sm:$0xff]
    %v34 = vld [vmem:[%s1 + $0x68] sm:$0xff]
    %v35 = vld [vmem:[%s1 + $0x70] sm:$0xff]
    %v36 = vld [vmem:[%s1 + $0x78] sm:$0xff]
    %v38 = vsel %vm17, %v15, 0
    %v41 = vsel %vm17, %v21, 0
    %v44 = vsel %vm17, %v22, 0
    %v47 = vsel %vm17, %v23, 0
    %v50 = vsel %vm17, %v24, 0
    %v53 = vsel %vm17, %v25, 0
    %v56 = vsel %vm17, %v26, 0
    %v59 = vsel %vm17, %v27, 0
    %v62 = vsel %vm17, %v28, 0
    %v65 = vsel %vm17, %v29, 0
    %v68 = vsel %vm17, %v30, 0
    %v71 = vsel %vm17, %v31, 0
    %v74 = vsel %vm17, %v32, 0
    %v77 = vsel %vm17, %v33, 0
    %v80 = vsel %vm17, %v34, 0
    %v83 = vsel %vm17, %v35, 0
    %v86 = vsel %vm17, %v36, 0
    %88 = vmatprep.subr.mxu0 0.0
    %89 = vmatpush1.xpose.msra.mxu0 %v41
    %90 = vmatprep.subr.mxu0 0.0
    %91 = vmatpush1.xpose.msra.mxu0 %v44
    %92 = vmatprep.subr.mxu0 0.0
    %93 = vmatpush1.xpose.msra.mxu0 %v47
    %94 = vmatprep.subr.mxu0 0.0
    %95 = vmatpush1.xpose.msra.mxu0 %v50
    %96 = vmatprep.subr.mxu0 0.0
    %97 = vmatpush1.xpose.msra.mxu0 %v53
    %98 = vmatprep.subr.mxu0 0.0
    %99 = vmatpush1.xpose.msra.mxu0 %v56
    %100 = vmatprep.subr.mxu0 0.0
    %101 = vmatpush1.xpose.msra.mxu0 %v59
    %102 = vmatprep.subr.mxu0 0.0
    %103 = vmatpush1.xpose.msra.mxu0 %v62
    %104 = vmatprep.subr.mxu0 0.0
    %105 = vmatpush1.xpose.msra.mxu0 %v65
    %106 = vmatprep.subr.mxu0 0.0
    %107 = vmatpush1.xpose.msra.mxu0 %v68
    %108 = vmatprep.subr.mxu0 0.0
    %109 = vmatpush1.xpose.msra.mxu0 %v71
    %110 = vmatprep.subr.mxu0 0.0
    %111 = vmatpush1.xpose.msra.mxu0 %v74
    %112 = vmatprep.subr.mxu0 0.0
    %113 = vmatpush1.xpose.msra.mxu0 %v77
    %114 = vmatprep.subr.mxu0 0.0
    %115 = vmatpush1.xpose.msra.mxu0 %v80
    %116 = vmatprep.subr.mxu0 0.0
    %117 = vmatpush1.xpose.msra.mxu0 %v83
    %118 = vmatprep.subr.mxu0 0.0
    %119 = vmatpush1.xpose.msra.mxu0 %v86
    %120 = vmatprep.subr.mxu0 0.0
    %121 = vmatpush1.xpose.msra.mxu0 0.0
    %122 = vmatprep.subr.mxu0 0.0
    %123 = vmatpush1.xpose.msra.mxu0 0.0
    %124 = vmatprep.subr.mxu0 0.0
    %125 = vmatpush1.xpose.msra.mxu0 0.0
    %126 = vmatprep.subr.mxu0 0.0
    %127 = vmatpush1.xpose.msra.mxu0 0.0
    %128 = vmatprep.subr.mxu0 0.0
    %129 = vmatpush1.xpose.msra.mxu0 0.0
    %130 = vmatprep.subr.mxu0 0.0
    %131 = vmatpush1.xpose.msra.mxu0 0.0
    %132 = vmatprep.subr.mxu0 0.0
    %133 = vmatpush1.xpose.msra.mxu0 0.0
    %134 = vmatprep.subr.mxu0 0.0
    %135 = vmatpush1.xpose.msra.mxu0 0.0
    %136 = vmatprep.subr.mxu0 0.0
    %137 = vmatpush1.xpose.msra.mxu0 0.0
    %138 = vmatprep.subr.mxu0 0.0
    %139 = vmatpush1.xpose.msra.mxu0 0.0
    %140 = vmatprep.subr.mxu0 0.0
    %141 = vmatpush1.xpose.msra.mxu0 0.0
    %142 = vmatprep.subr.mxu0 0.0
    %143 = vmatpush1.xpose.msra.mxu0 0.0
    %144 = vmatprep.subr.mxu0 0.0
    %145 = vmatpush1.xpose.msra.mxu0 0.0
    %146 = vmatprep.subr.mxu0 0.0
    %147 = vmatpush1.xpose.msra.mxu0 0.0
    %148 = vmatprep.subr.mxu0 0.0
    %149 = vmatpush1.xpose.msra.mxu0 0.0
    %150 = vmatprep.subr.mxu0 0.0
    %151 = vmatpush1.xpose.msra.mxu0 0.0
    %152 = vmatprep.mubr.f32.mxu0 0.0
    %153 = vmatmul.mubr.f32.gmra.mrb[0].mxu0 %v38
    %v154 = vpop.f32.mrb[0].mxu0
    %v155 = vadd.f32 0.0, %v154
    %v156 = vpop.f32.mrb[0].mxu0
    %157 = vdwg.mxu0
    %v158 = vld [vmem:[%s2] sm:$0x1]
    %v160 = vlaneseq
    %v161 = vshrl.u32 %v160, 7
    %v162 = vsub.s32 0, %v161
    %v163 = vrot.slane %v158, %v162
    %v165 = vadd.f32 %v20, %v163
    %v166 = vmul.f32 %v155, 2.0
    %v167 = vsub.f32 %v165, %v166
    %v168 = vmax.f32 %v167, 0.0
    %v169 = vadd.f32 %v168, 1.0
    %v170 = vrcp.pop %v169
    %v171 = vmul.f32 1.0, %v170
    %v172 = vlaneseq
    %v173 = vand.u32 %v172, 127
    %vm174 = vcmp.lt.s32.totalorder %v173, 4
    %v175 = vsel %vm174, %v171, 0.0
    %176 = vadd.xlane.f32.xlu0 %v175
    %v177 = vpop.xlane.xlu0 %176
    %v178 = vrcp.pop %v177
    %v179 = vmul.f32 %v177, %v178
    %v180 = vsub.f32 2.0, %v179
    %v181 = vmul.f32 %v178, %v180
    %v182 = vmul.f32 %v175, %v181
    %183 = vst [vmem:[#allocation2] sm:$0xff] %v182
    // Predicated region
    $region14: #{tpu_custom_call.1} parent=1 // pred_check
      _
    $region15: #{tpu_custom_call.1} parent=1 // pred_check_branch
      %185 = sbr.rel (0) target = $region17
    $region16: #{tpu_custom_call.1} parent=1 // pred_region
      %s187 = ssub.s32 128, 128
      %188 = vsyncadd [#allocation3], %s187
      %s190 = sshll.u32 [#allocation2], 4
      %s191 = int_to_ptr.vmem [resolvable:$true] %s190
      %193 = dma.vmem_to_hbm [thread:$0]  %s191, 128, %s3, [#allocation3]
    $region17: #{tpu_custom_call.1} parent=1 // pred_fallthru
      _
    // Predicated region
    $region18: #{tpu_custom_call.1} parent=1 // pred_check
      _
    $region19: #{tpu_custom_call.1} parent=1 // pred_check_branch
      %195 = sbr.rel (0) target = $region21
    $region20: #{tpu_custom_call.1} parent=1 // pred_region
      %196 = dma.done [#allocation3], 128
    $region21: #{tpu_custom_call.1} parent=1 // pred_fallthru
      _
    %197 = vsyncpa [#allocation3], 1

</llo_original>
